<compile_context>
chip_gen: v7x
topology: tpu7x:2x2x1
jax: 0.10.0
libtpu: 0.0.40
codegen_flags: <defaults>
</compile_context>

<pallas_src>
import math

import jax
import jax.numpy as jnp
from jax.experimental import pallas as pl
from jax.experimental.pallas import tpu as pltpu


# ArcMarginProduct constants (module defaults: s=30, m=0.3, easy_margin=False,
# ls_eps=0.0).
_S_SCALE = 30.0
_MARGIN = 0.3
_COS_M = math.cos(_MARGIN)
_SIN_M = math.sin(_MARGIN)
_TH = math.cos(math.pi - _MARGIN)
_MM = math.sin(math.pi - _MARGIN) * _MARGIN

_NEG_BIG = -1e30  # pre-softmax fill for padded chain columns


def _round_up(x, m):
    return ((x + m - 1) // m) * m


# ---------------------------------------------------------------------------
# Kernel 1: SEBlock x2 squeeze (fused first layer) + GeM pooling.
#   in : x (B, HW, C), w1cat (C, 2*Cr), se1_w2 (Cr, C), se2_w2 (Cr, C)
#   out: s1 (B, C), s2 (B, C), gem (B, C)
# ---------------------------------------------------------------------------
def se_gem_kernel(x_ref, w1cat_ref, w2a_ref, w2b_ref, s1_ref, s2_ref, gem_ref):
    x = x_ref[...]                                        # (B, HW, C) f32

    # SE "squeeze": AdaptiveAvgPool2d(1) == mean over spatial.
    y = jnp.mean(x, axis=1)                               # (B, C)

    # Both branches' first Linear fused into one (C, 2*Cr) matmul.
    h = jnp.maximum(
        jnp.dot(y, w1cat_ref[...], preferred_element_type=jnp.float32), 0.0)
    cr = w2a_ref.shape[0]
    s1_ref[...] = jax.nn.sigmoid(
        jnp.dot(h[:, :cr], w2a_ref[...], preferred_element_type=jnp.float32))
    s2_ref[...] = jax.nn.sigmoid(
        jnp.dot(h[:, cr:], w2b_ref[...], preferred_element_type=jnp.float32))

    # GeM pooling: mean(clamp(x, eps)^3)^(1/3).  Explicit cube keeps the
    # B*HW*C elementwise work on the VPU instead of the single EUP slot.
    v = jnp.maximum(x, 1e-6)
    g = jnp.mean(v * v * v, axis=1)                       # (B, C), > 0
    gem_ref[...] = jnp.exp(jnp.log(g) * (1.0 / 3.0))      # cube root (B*C only)


# ---------------------------------------------------------------------------
# Kernel 2: folded OSME fc1/fc2 + chain_fc + softmax, streamed over HW tiles.
#   grid : (HW // THW,)  ("arbitrary" -- float32 accumulator across tiles)
#   in   : x_tile (THW, B, C) f32, s1/s2 (B, C) f32,
#          wfold_tile (THW, 2C, CO_pad) bf16, bfold (1, CO_pad) f32
#   out  : chain softmax (B, CO_pad)
# ---------------------------------------------------------------------------
def chain_kernel(x_ref, s1_ref, s2_ref, w_ref, b_ref, out_ref, acc_ref):
    k = pl.program_id(0)

    @pl.when(k == 0)
    def _():
        acc_ref[...] = jnp.zeros_like(acc_ref)

    s1 = s1_ref[...]                                      # (B, C)
    s2 = s2_ref[...]
    thw = x_ref.shape[0]

    acc = acc_ref[...]
    for t in range(thw):                                  # static, THW small (7)
        xt = x_ref[t]                                     # (B, C)
        # [x*s1 | x*s2] @ [W1'; W2']  == x*s1 @ W1' + x*s2 @ W2'
        xe = jnp.concatenate([xt * s1, xt * s2], axis=-1)  # (B, 2C)
        acc = acc + jnp.dot(xe.astype(w_ref.dtype), w_ref[t],
                            preferred_element_type=jnp.float32)
    acc_ref[...] = acc

    @pl.when(k == pl.num_programs(0) - 1)
    def _():
        # Folded bias; padded lanes carry -1e30 so they vanish in the softmax.
        z = acc + b_ref[...]
        z = z - jnp.max(z, axis=1, keepdims=True)
        e = jnp.exp(z)
        out_ref[...] = e / jnp.sum(e, axis=1, keepdims=True)   # Softmax(dim=1)


# ---------------------------------------------------------------------------
# Kernel 3: fc -> BatchNorm1d -> ArcMarginProduct, tiled over padded classes.
#   grid : (N_pad // TN,)  ("parallel" -- tiles are independent)
# ---------------------------------------------------------------------------
def arc_kernel(gem_ref, label_ref, fc_w_ref, fc_b_ref, bn_g_ref, bn_b_ref,
               arc_w_ref, out_ref):
    # fc -> BatchNorm1d (training-mode batch stats, biased variance, eps=1e-5).
    feat = jnp.dot(gem_ref[...], fc_w_ref[...],
                   preferred_element_type=jnp.float32) + fc_b_ref[...]
    mu = jnp.mean(feat, axis=0, keepdims=True)
    var = jnp.mean(jnp.square(feat - mu), axis=0, keepdims=True)
    feat = (feat - mu) * jax.lax.rsqrt(var + 1e-5) * bn_g_ref[...] + bn_b_ref[...]

    # ArcMarginProduct on one class tile.
    xn = feat / jnp.maximum(
        jnp.sqrt(jnp.sum(feat * feat, axis=1, keepdims=True)), 1e-12)
    w = arc_w_ref[...].astype(jnp.float32)                # (fc_dim, TN)
    wn = w / jnp.maximum(
        jnp.sqrt(jnp.sum(w * w, axis=0, keepdims=True)), 1e-12)
    cosine = jnp.dot(xn, wn, preferred_element_type=jnp.float32)   # (B, TN)
    # clamp only guards fp rounding when cosine^2 marginally exceeds 1
    sine = jnp.sqrt(jnp.maximum(1.0 - cosine * cosine, 0.0))
    phi = cosine * _COS_M - sine * _SIN_M
    phi = jnp.where(cosine > _TH, phi, cosine - _MM)       # easy_margin=False

    tn = out_ref.shape[1]
    cls = (jax.lax.broadcasted_iota(jnp.int32, cosine.shape, 1)
           + pl.program_id(0) * tn)
    one_hot = (cls == label_ref[...]).astype(jnp.float32)  # scatter one-hot
    out_ref[...] = (one_hot * phi + (1.0 - one_hot) * cosine) * _S_SCALE


# ---------------------------------------------------------------------------
# Parameters
# ---------------------------------------------------------------------------
def init_params(key, *, C, H, W, d, reduction, fc_dim, n_classes, chain_out):
    """Deterministic synthetic parameter init (shapes follow the module).

    Linear weights are stored as (in_features, out_features) for x @ W.  The
    fc1/fc2 input ordering is HW-major, C-minor, i.e. the permuted torch
    weight of a channels-last flatten."""
    HW = H * W
    Cr = C // reduction
    ks = jax.random.split(key, 12)

    def u(k, shape, scale):
        return jax.random.uniform(k, shape, jnp.float32, -scale, scale)

    return {
        # SEBlock fc (no bias).
        "se1_w1": u(ks[0], (C, Cr), 1.0 / math.sqrt(C)),
        "se1_w2": u(ks[1], (Cr, C), 1.0 / math.sqrt(Cr)),
        "se2_w1": u(ks[2], (C, Cr), 1.0 / math.sqrt(C)),
        "se2_w2": u(ks[3], (Cr, C), 1.0 / math.sqrt(Cr)),
        # OSME fc1/fc2: Linear(C*H*W, d).
        "fc1_w": u(ks[4], (HW * C, d), 1.0 / math.sqrt(HW * C)),
        "fc1_b": u(ks[5], (1, d), 1.0 / math.sqrt(HW * C)),
        "fc2_w": u(ks[6], (HW * C, d), 1.0 / math.sqrt(HW * C)),
        "fc2_b": u(ks[7], (1, d), 1.0 / math.sqrt(HW * C)),
        # chain_fc: Linear(2*d, chain_out).
        "chain_w": u(ks[8], (2 * d, chain_out), 1.0 / math.sqrt(2 * d)),
        "chain_b": u(ks[9], (1, chain_out), 1.0 / math.sqrt(2 * d)),
        # fc: Linear(C, fc_dim), xavier-style init, zero bias.
        "fc_w": u(ks[10], (C, fc_dim), math.sqrt(6.0 / (C + fc_dim))),
        "fc_b": jnp.zeros((1, fc_dim), jnp.float32),
        # bn: gamma=1, beta=0 (per _init_params).
        "bn_g": jnp.ones((1, fc_dim), jnp.float32),
        "bn_b": jnp.zeros((1, fc_dim), jnp.float32),
        # ArcMargin weight stored transposed: (in_features, out_features).
        "arc_w": u(ks[11], (fc_dim, n_classes),
                   math.sqrt(6.0 / (fc_dim + n_classes))),
    }


def prepare_head_params(params, *, class_tile=512):
    """One-time (per weight set) preparation:
      * fold chain_fc into fc1/fc2 (no nonlinearity in between and f1/f2 are
        not module outputs -> mathematically equivalent up to f32
        reassociation); ~11x less streamed weight at production shapes,
      * pad chain_out / n_classes to lane-dense multiples of 128,
      * cast the large streamed weights to bf16 (f32 accumulation in-kernel),
      * fuse the two SE-branch squeeze weights into one matmul operand."""
    C, _ = params["se1_w1"].shape
    K, d = params["fc1_w"].shape
    HW = K // C
    co = params["chain_w"].shape[1]
    co_pad = _round_up(co, 128)

    # Folded chain weights, reshaped to (HW, C, CO_pad) (HW-major, C-minor).
    w1p = params["fc1_w"] @ params["chain_w"][:d]          # (K, co)
    w2p = params["fc2_w"] @ params["chain_w"][d:]          # (K, co)
    pad = ((0, 0), (0, co_pad - co))
    w1p = jnp.pad(w1p, pad).reshape(HW, C, co_pad)
    w2p = jnp.pad(w2p, pad).reshape(HW, C, co_pad)
    wfold = jnp.concatenate([w1p, w2p], axis=1).astype(jnp.bfloat16)

    bf = (params["fc1_b"] @ params["chain_w"][:d]
          + params["fc2_b"] @ params["chain_w"][d:]
          + params["chain_b"])                             # (1, co)
    bfold = jnp.concatenate(
        [bf, jnp.full((1, co_pad - co), _NEG_BIG, jnp.float32)], axis=1)

    n_classes = params["arc_w"].shape[1]
    tn = min(class_tile, _round_up(n_classes, 128))
    n_pad = _round_up(n_classes, tn)
    arc_w = jnp.pad(params["arc_w"],
                    ((0, 0), (0, n_pad - n_classes))).astype(jnp.bfloat16)

    return {
        "se_w1cat": jnp.concatenate([params["se1_w1"], params["se2_w1"]], axis=1),
        "se1_w2": params["se1_w2"],
        "se2_w2": params["se2_w2"],
        "wfold": wfold,          # (HW, 2C, CO_pad) bf16
        "bfold": bfold,          # (1, CO_pad) f32
        "fc_w": params["fc_w"],
        "fc_b": params["fc_b"],
        "bn_g": params["bn_g"],
        "bn_b": params["bn_b"],
        "arc_w": arc_w,          # (fc_dim, N_pad) bf16
        "chain_out": co,
        "n_classes": n_classes,
        "class_tile": tn,
    }


# ---------------------------------------------------------------------------
# Wrapper
# ---------------------------------------------------------------------------
def angular_osme_chain_head(x_nchw, label, prep):
    B, C, H, W = x_nchw.shape
    HW = H * W
    co = prep["chain_out"]
    co_pad = prep["bfold"].shape[1]
    n_classes = prep["n_classes"]
    tn = prep["class_tile"]
    n_pad = prep["arc_w"].shape[1]
    fc_dim = prep["fc_w"].shape[1]

    vmem = pl.BlockSpec(memory_space=pltpu.MemorySpace.VMEM)

    # glue: NCHW -> channels-last (B, HW, C)
    x_blc = jnp.transpose(x_nchw, (0, 2, 3, 1)).reshape(B, HW, C).astype(jnp.float32)

    # ---- kernel 1: SE excitation scales + GeM (no xse HBM round trip) ----
    s1, s2, g = pl.pallas_call(
        se_gem_kernel,
        out_shape=(jax.ShapeDtypeStruct((B, C), jnp.float32),
                   jax.ShapeDtypeStruct((B, C), jnp.float32),
                   jax.ShapeDtypeStruct((B, C), jnp.float32)),
        in_specs=[vmem] * 4,
        out_specs=(vmem, vmem, vmem),
    )(x_blc, prep["se_w1cat"], prep["se1_w2"], prep["se2_w2"])

    # ---- kernel 2: folded fc1/fc2/chain_fc + softmax, streamed over HW ----
    x_tbc = jnp.transpose(x_blc, (1, 0, 2))                # (HW, B, C)
    thw = 7 if HW % 7 == 0 else HW                         # 49 -> 7 tiles
    nk = HW // thw
    chain_cost = pl.CostEstimate(
        flops=2 * B * HW * 2 * C * co_pad,
        transcendentals=B * co_pad,
        bytes_accessed=(prep["wfold"].size * 2 + x_tbc.size * 4
                        + B * co_pad * 4),
    )
    chain_p = pl.pallas_call(
        chain_kernel,
        out_shape=jax.ShapeDtypeStruct((B, co_pad), jnp.float32),
        grid=(nk,),
        in_specs=[
            pl.BlockSpec((thw, B, C), lambda k: (k, 0, 0)),        # x tiles
            pl.BlockSpec((B, C), lambda k: (0, 0)),                # s1
            pl.BlockSpec((B, C), lambda k: (0, 0)),                # s2
            pl.BlockSpec((thw, 2 * C, co_pad), lambda k: (k, 0, 0)),  # wfold
            pl.BlockSpec((1, co_pad), lambda k: (0, 0)),           # bfold
        ],
        out_specs=pl.BlockSpec((B, co_pad), lambda k: (0, 0)),
        scratch_shapes=[pltpu.VMEM((B, co_pad), jnp.float32)],
        compiler_params=pltpu.CompilerParams(
            dimension_semantics=("arbitrary",),
            vmem_limit_bytes=48 * 1024 * 1024),
        cost_estimate=chain_cost,
    )(x_tbc, s1, s2, prep["wfold"], prep["bfold"])
    chain = chain_p[:, :co]

    # ---- kernel 3: fc -> BN -> ArcMargin, class-tiled ('parallel') --------
    arc_cost = pl.CostEstimate(
        flops=2 * B * C * fc_dim + 2 * B * fc_dim * n_pad,
        transcendentals=2 * B * n_pad,
        bytes_accessed=prep["arc_w"].size * 2 + C * fc_dim * 4 + B * n_pad * 4,
    )
    logits_p = pl.pallas_call(
        arc_kernel,
        out_shape=jax.ShapeDtypeStruct((B, n_pad), jnp.float32),
        grid=(n_pad // tn,),
        in_specs=[
            pl.BlockSpec((B, C), lambda j: (0, 0)),                # gem
            pl.BlockSpec((B, 1), lambda j: (0, 0)),                # label
            pl.BlockSpec((C, fc_dim), lambda j: (0, 0)),           # fc_w
            pl.BlockSpec((1, fc_dim), lambda j: (0, 0)),           # fc_b
            pl.BlockSpec((1, fc_dim), lambda j: (0, 0)),           # bn_g
            pl.BlockSpec((1, fc_dim), lambda j: (0, 0)),           # bn_b
            pl.BlockSpec((fc_dim, tn), lambda j: (0, j)),          # arc_w tile
        ],
        out_specs=pl.BlockSpec((B, tn), lambda j: (0, j)),
        compiler_params=pltpu.CompilerParams(
            dimension_semantics=("parallel",),
            vmem_limit_bytes=48 * 1024 * 1024),
        cost_estimate=arc_cost,
    )(g, label.reshape(B, 1).astype(jnp.int32),
      prep["fc_w"], prep["fc_b"], prep["bn_g"], prep["bn_b"], prep["arc_w"])
    logits = logits_p[:, :n_classes]

    return logits, chain


if __name__ == "__main__":
    # Small shapes consistent with the head: feature map (B, C, 7, 7); OSME d,
    # fc_dim, n_classes scaled down from (512, 7, 1024 / 512 / 7770).  B=8
    # fills the sublane dimension.
    B, C, H, W = 8, 64, 7, 7
    d, reduction, fc_dim, n_classes, chain_out = 128, 16, 128, 256, 88

    key = jax.random.PRNGKey(0)
    kx, kl, kp = jax.random.split(key, 3)
    x = jax.random.normal(kx, (B, C, H, W), jnp.float32)   # backbone feature map
    label = jax.random.randint(kl, (B,), 0, n_classes)

    params = init_params(kp, C=C, H=H, W=W, d=d, reduction=reduction,
                         fc_dim=fc_dim, n_classes=n_classes, chain_out=chain_out)
    prep = prepare_head_params(params)

    logits, chain = angular_osme_chain_head(x, label, prep)
    jax.block_until_ready((logits, chain))
    assert logits.shape == (B, n_classes) and chain.shape == (B, chain_out)
    print("KERNEL_OK")
</pallas_src>

<mosaic_0001>
module attributes {stable_mosaic.version = 11 : i64} {
  func.func @se_gem_kernel(%arg0: memref<8x49x64xf32, #tpu.memory_space<vmem>>, %arg1: memref<64x8xf32, #tpu.memory_space<vmem>>, %arg2: memref<4x64xf32, #tpu.memory_space<vmem>>, %arg3: memref<4x64xf32, #tpu.memory_space<vmem>>, %arg4: memref<8x64xf32, #tpu.memory_space<vmem>>, %arg5: memref<8x64xf32, #tpu.memory_space<vmem>>, %arg6: memref<8x64xf32, #tpu.memory_space<vmem>>) attributes {dimension_semantics = [], scalar_prefetch = 0 : i64, scratch_operands = 0 : i64, tpu.core_type = #tpu.core_type<tc>} {
    %c0 = arith.constant 0 : index
    %c0_0 = arith.constant 0 : index
    %c0_1 = arith.constant 0 : index
    %0 = vector.load %arg0[%c0, %c0_0, %c0_1] : memref<8x49x64xf32, #tpu.memory_space<vmem>>, vector<8x49x64xf32>
    %cst = arith.constant dense<0.000000e+00> : vector<8x64xf32>
    %1 = vector.multi_reduction <add>, %0, %cst [1] : vector<8x49x64xf32> to vector<8x64xf32>
    %cst_2 = arith.constant 4.900000e+01 : f32
    %2 = vector.broadcast %cst_2 : f32 to vector<8x64xf32>
    %3 = arith.divf %1, %2 : vector<8x64xf32>
    %c0_3 = arith.constant 0 : index
    %c0_4 = arith.constant 0 : index
    %4 = vector.load %arg1[%c0_3, %c0_4] : memref<64x8xf32, #tpu.memory_space<vmem>>, vector<64x8xf32>
    %cst_5 = arith.constant dense<0.000000e+00> : vector<8x8xf32>
    %5 = tpu.matmul %3, %4, %cst_5 {dimension_numbers = #tpu.dot_dimension_numbers<[1], [0], [0], [1], [0, 0, 1, 1], [], []>} : vector<8x64xf32>, vector<64x8xf32>, vector<8x8xf32> -> vector<8x8xf32>
    %cst_6 = arith.constant 0.000000e+00 : f32
    %6 = vector.broadcast %cst_6 : f32 to vector<8x8xf32>
    %7 = arith.maximumf %5, %6 : vector<8x8xf32>
    %8 = vector.extract_strided_slice %7 {offsets = [0, 0], sizes = [8, 4], strides = [1, 1]} : vector<8x8xf32> to vector<8x4xf32>
    %c0_7 = arith.constant 0 : index
    %c0_8 = arith.constant 0 : index
    %9 = vector.load %arg2[%c0_7, %c0_8] : memref<4x64xf32, #tpu.memory_space<vmem>>, vector<4x64xf32>
    %cst_9 = arith.constant dense<0.000000e+00> : vector<8x64xf32>
    %10 = tpu.matmul %8, %9, %cst_9 {dimension_numbers = #tpu.dot_dimension_numbers<[1], [0], [0], [1], [0, 0, 1, 1], [], []>} : vector<8x4xf32>, vector<4x64xf32>, vector<8x64xf32> -> vector<8x64xf32>
    %11 = arith.negf %10 : vector<8x64xf32>
    %12 = math.exp %11 : vector<8x64xf32>
    %cst_10 = arith.constant 1.000000e+00 : f32
    %13 = vector.broadcast %cst_10 : f32 to vector<8x64xf32>
    %14 = arith.addf %13, %12 : vector<8x64xf32>
    %15 = arith.divf %13, %14 : vector<8x64xf32>
    %c0_11 = arith.constant 0 : index
    %c0_12 = arith.constant 0 : index
    %16 = vector.load %arg4[%c0_11, %c0_12] : memref<8x64xf32, #tpu.memory_space<vmem>>, vector<8x64xf32>
    tpu.vector_store %arg4[%c0_11, %c0_12], %15 {strides = array<i32>} : memref<8x64xf32, #tpu.memory_space<vmem>>, vector<8x64xf32>,
    %17 = vector.extract_strided_slice %7 {offsets = [0, 4], sizes = [8, 4], strides = [1, 1]} : vector<8x8xf32> to vector<8x4xf32>
    %c0_13 = arith.constant 0 : index
    %c0_14 = arith.constant 0 : index
    %18 = vector.load %arg3[%c0_13, %c0_14] : memref<4x64xf32, #tpu.memory_space<vmem>>, vector<4x64xf32>
    %cst_15 = arith.constant dense<0.000000e+00> : vector<8x64xf32>
    %19 = tpu.matmul %17, %18, %cst_15 {dimension_numbers = #tpu.dot_dimension_numbers<[1], [0], [0], [1], [0, 0, 1, 1], [], []>} : vector<8x4xf32>, vector<4x64xf32>, vector<8x64xf32> -> vector<8x64xf32>
    %20 = arith.negf %19 : vector<8x64xf32>
    %21 = math.exp %20 : vector<8x64xf32>
    %cst_16 = arith.constant 1.000000e+00 : f32
    %22 = vector.broadcast %cst_16 : f32 to vector<8x64xf32>
    %23 = arith.addf %22, %21 : vector<8x64xf32>
    %24 = arith.divf %22, %23 : vector<8x64xf32>
    %c0_17 = arith.constant 0 : index
    %c0_18 = arith.constant 0 : index
    %25 = vector.load %arg5[%c0_17, %c0_18] : memref<8x64xf32, #tpu.memory_space<vmem>>, vector<8x64xf32>
    tpu.vector_store %arg5[%c0_17, %c0_18], %24 {strides = array<i32>} : memref<8x64xf32, #tpu.memory_space<vmem>>, vector<8x64xf32>,
    %cst_19 = arith.constant 9.99999997E-7 : f32
    %26 = vector.broadcast %cst_19 : f32 to vector<8x49x64xf32>
    %27 = arith.maximumf %0, %26 : vector<8x49x64xf32>
    %28 = arith.mulf %27, %27 : vector<8x49x64xf32>
    %29 = arith.mulf %28, %27 : vector<8x49x64xf32>
    %cst_20 = arith.constant dense<0.000000e+00> : vector<8x64xf32>
    %30 = vector.multi_reduction <add>, %29, %cst_20 [1] : vector<8x49x64xf32> to vector<8x64xf32>
    %cst_21 = arith.constant 4.900000e+01 : f32
    %31 = vector.broadcast %cst_21 : f32 to vector<8x64xf32>
    %32 = arith.divf %30, %31 : vector<8x64xf32>
    %33 = math.log %32 : vector<8x64xf32>
    %cst_22 = arith.constant 0.333333343 : f32
    %34 = vector.broadcast %cst_22 : f32 to vector<8x64xf32>
    %35 = arith.mulf %33, %34 : vector<8x64xf32>
    %36 = math.exp %35 : vector<8x64xf32>
    %c0_23 = arith.constant 0 : index
    %c0_24 = arith.constant 0 : index
    %37 = vector.load %arg6[%c0_23, %c0_24] : memref<8x64xf32, #tpu.memory_space<vmem>>, vector<8x64xf32>
    tpu.vector_store %arg6[%c0_23, %c0_24], %36 {strides = array<i32>} : memref<8x64xf32, #tpu.memory_space<vmem>>, vector<8x64xf32>,
    return
  }
}

</mosaic_0001>

<llo_original>
// kernel: tpu_custom_call.1
$region0: #{tpu_custom_call.1}
  #allocation0 [shape = 'u32[]', space=smem, size = 0x4, offset = 0x4, fixed_abs, tag = 'smem constant byte address 0x4 - core index']
  #allocation1 [shape = 'u32[144,128]{1,0:T(1,128)}', space=vmem, size = 0x12000, scoped, tag = 'internal scratch']
  %s0 = inlined_call_operand.vmem [shape: f32[8,49,64], index: 0, kind: input, shape index: {}]
  %s1 = inlined_call_operand.vmem [shape: f32[64,8], index: 1, kind: input, shape index: {}]
  %s2 = inlined_call_operand.vmem [shape: f32[4,64], index: 2, kind: input, shape index: {}]
  %s3 = inlined_call_operand.vmem [shape: f32[4,64], index: 3, kind: input, shape index: {}]
  %s4 = inlined_call_operand.hbm [shape: f32[8,64], index: 4, kind: output, shape index: {0}]
  %s5 = inlined_call_operand.hbm [shape: f32[8,64], index: 5, kind: output, shape index: {1}]
  %s6 = inlined_call_operand.hbm [shape: f32[8,64], index: 6, kind: output, shape index: {2}]
  %7 = xla_tuple %s4, %s5, %s6
  %s8 = sld [smem:[#allocation0]]
  $region42: #{tpu_custom_call.1} parent=0
    _
  %s10 = ssub.s32 1, %s8
  %s11 = scalar_select 0, %s10, %s8
  $region1: #{tpu_custom_call.1} parent=0
    #allocation2 [shape = 'u8[4096]{0}', space=vmem, size = 0x1000, scoped, tag = 'output window, operand 0, single buffered']
    #allocation3 [shape = 's32[1]{0}', space=sflag, size = 0x4, scoped, tag = 'scoped memory for tpu_custom_call.1']
    #allocation4 [shape = 'u8[4096]{0}', space=vmem, size = 0x1000, scoped, tag = 'output window, operand 1, single buffered']
    #allocation5 [shape = 's32[1]{0}', space=sflag, size = 0x4, scoped, tag = 'scoped memory for tpu_custom_call.1']
    #allocation6 [shape = 'u8[4096]{0}', space=vmem, size = 0x1000, scoped, tag = 'output window, operand 2, single buffered']
    %12 = vsyncpa [#allocation3], 0
    %13 = vsyncpa [#allocation5], 0
    // Predicated region
    $region2: #{tpu_custom_call.1} parent=1 // pred_check
      _
    $region3: #{tpu_custom_call.1} parent=1 // pred_check_branch
      %15 = sbr.rel (0) target = $region5
    $region4: #{tpu_custom_call.1} parent=1 // pred_region
      _
    $region5: #{tpu_custom_call.1} parent=1 // pred_fallthru
      _
    // Predicated region
    $region6: #{tpu_custom_call.1} parent=1 // pred_check
      _
    $region7: #{tpu_custom_call.1} parent=1 // pred_check_branch
      %17 = sbr.rel (0) target = $region9
    $region8: #{tpu_custom_call.1} parent=1 // pred_region
      _
    $region9: #{tpu_custom_call.1} parent=1 // pred_fallthru
      _
    // Predicated region
    $region10: #{tpu_custom_call.1} parent=1 // pred_check
      _
    $region11: #{tpu_custom_call.1} parent=1 // pred_check_branch
      %19 = sbr.rel (0) target = $region13
    $region12: #{tpu_custom_call.1} parent=1 // pred_region
      _
    $region13: #{tpu_custom_call.1} parent=1 // pred_fallthru
      _
    // Predicated region
    $region14: #{tpu_custom_call.1} parent=1 // pred_check
      _
    $region15: #{tpu_custom_call.1} parent=1 // pred_check_branch
      %21 = sbr.rel (0) target = $region17
    $region16: #{tpu_custom_call.1} parent=1 // pred_region
      _
    $region17: #{tpu_custom_call.1} parent=1 // pred_fallthru
      _
    %v22 = vld [vmem:[%s0] sm:$0xff]
    %v23 = vld [vmem:[%s0 + $0x8] sm:$0xff]
    %v24 = vld [vmem:[%s0 + $0x10] sm:$0xff]
    %v25 = vld [vmem:[%s0 + $0x18] sm:$0xff]
    %v26 = vld [vmem:[%s0 + $0x20] sm:$0xff]
    %v27 = vld [vmem:[%s0 + $0x28] sm:$0xff]
    %v28 = vld [vmem:[%s0 + $0x30] sm:$0x1]
    %v29 = vld [vmem:[%s0 + $0x38] sm:$0xff]
    %v30 = vld [vmem:[%s0 + $0x40] sm:$0xff]
    %v31 = vld [vmem:[%s0 + $0x48] sm:$0xff]
    %v32 = vld [vmem:[%s0 + $0x50] sm:$0xff]
    %v33 = vld [vmem:[%s0 + $0x58] sm:$0xff]
    %v34 = vld [vmem:[%s0 + $0x60] sm:$0xff]
    %v35 = vld [vmem:[%s0 + $0x68] sm:$0x1]
    %v36 = vld [vmem:[%s0 + $0x70] sm:$0xff]
    %v37 = vld [vmem:[%s0 + $0x78] sm:$0xff]
    %v38 = vld [vmem:[%s0 + $0x80] sm:$0xff]
    %v39 = vld [vmem:[%s0 + $0x88] sm:$0xff]
    %v40 = vld [vmem:[%s0 + $0x90] sm:$0xff]
    %v41 = vld [vmem:[%s0 + $0x98] sm:$0xff]
    %v42 = vld [vmem:[%s0 + $0xa0] sm:$0x1]
    %v43 = vld [vmem:[%s0 + $0xa8] sm:$0xff]
    %v44 = vld [vmem:[%s0 + $0xb0] sm:$0xff]
    %v45 = vld [vmem:[%s0 + $0xb8] sm:$0xff]
    %v46 = vld [vmem:[%s0 + $0xc0] sm:$0xff]
    %v47 = vld [vmem:[%s0 + $0xc8] sm:$0xff]
    %v48 = vld [vmem:[%s0 + $0xd0] sm:$0xff]
    %v49 = vld [vmem:[%s0 + $0xd8] sm:$0x1]
    %v50 = vld [vmem:[%s0 + $0xe0] sm:$0xff]
    %v51 = vld [vmem:[%s0 + $0xe8] sm:$0xff]
    %v52 = vld [vmem:[%s0 + $0xf0] sm:$0xff]
    %v53 = vld [vmem:[%s0 + $0xf8] sm:$0xff]
    %v54 = vld [vmem:[%s0 + $0x100] sm:$0xff]
    %v55 = vld [vmem:[%s0 + $0x108] sm:$0xff]
    %v56 = vld [vmem:[%s0 + $0x110] sm:$0x1]
    %v57 = vld [vmem:[%s0 + $0x118] sm:$0xff]
    %v58 = vld [vmem:[%s0 + $0x120] sm:$0xff]
    %v59 = vld [vmem:[%s0 + $0x128] sm:$0xff]
    %v60 = vld [vmem:[%s0 + $0x130] sm:$0xff]
    %v61 = vld [vmem:[%s0 + $0x138] sm:$0xff]
    %v62 = vld [vmem:[%s0 + $0x140] sm:$0xff]
    %v63 = vld [vmem:[%s0 + $0x148] sm:$0x1]
    %v64 = vld [vmem:[%s0 + $0x150] sm:$0xff]
    %v65 = vld [vmem:[%s0 + $0x158] sm:$0xff]
    %v66 = vld [vmem:[%s0 + $0x160] sm:$0xff]
    %v67 = vld [vmem:[%s0 + $0x168] sm:$0xff]
    %v68 = vld [vmem:[%s0 + $0x170] sm:$0xff]
    %v69 = vld [vmem:[%s0 + $0x178] sm:$0xff]
    %v70 = vld [vmem:[%s0 + $0x180] sm:$0x1]
    %v71 = vld [vmem:[%s0 + $0x188] sm:$0xff]
    %v72 = vld [vmem:[%s0 + $0x190] sm:$0xff]
    %v73 = vld [vmem:[%s0 + $0x198] sm:$0xff]
    %v74 = vld [vmem:[%s0 + $0x1a0] sm:$0xff]
    %v75 = vld [vmem:[%s0 + $0x1a8] sm:$0xff]
    %v76 = vld [vmem:[%s0 + $0x1b0] sm:$0xff]
    %v77 = vld [vmem:[%s0 + $0x1b8] sm:$0x1]
    %vm78 = vcmask 523264
    %v79 = vsel %vm78, %v22, 0.0
    %v80 = vsel %vm78, %v23, 0.0
    %v81 = vadd.f32 %v79, %v80
    %v82 = vsel %vm78, %v24, 0.0
    %v83 = vadd.f32 %v81, %v82
    %v84 = vsel %vm78, %v25, 0.0
    %v85 = vadd.f32 %v83, %v84
    %v86 = vsel %vm78, %v26, 0.0
    %v87 = vadd.f32 %v85, %v86
    %v88 = vsel %vm78, %v27, 0.0
    %v89 = vadd.f32 %v87, %v88
    %vm90 = vcmask 516096
    %v91 = vsel %vm90, %v28, 0.0
    %v92 = vadd.f32 %v89, %v91
    %v93 = vrot.slane %v92, 4
    %v94 = vadd.f32 %v92, %v93
    %v95 = vrot.slane %v94, 2
    %v96 = vadd.f32 %v94, %v95
    %v97 = vrot.slane %v96, 1
    %v98 = vadd.f32 %v96, %v97
    %v99 = vsel %vm78, %v29, 0.0
    %v100 = vsel %vm78, %v30, 0.0
    %v101 = vadd.f32 %v99, %v100
    %v102 = vsel %vm78, %v31, 0.0
    %v103 = vadd.f32 %v101, %v102
    %v104 = vsel %vm78, %v32, 0.0
    %v105 = vadd.f32 %v103, %v104
    %v106 = vsel %vm78, %v33, 0.0
    %v107 = vadd.f32 %v105, %v106
    %v108 = vsel %vm78, %v34, 0.0
    %v109 = vadd.f32 %v107, %v108
    %v110 = vsel %vm90, %v35, 0.0
    %v111 = vadd.f32 %v109, %v110
    %v112 = vrot.slane %v111, 4
    %v113 = vadd.f32 %v111, %v112
    %v114 = vrot.slane %v113, 2
    %v115 = vadd.f32 %v113, %v114
    %v116 = vrot.slane %v115, 1
    %v117 = vadd.f32 %v115, %v116
    %v118 = vsel %vm78, %v36, 0.0
    %v119 = vsel %vm78, %v37, 0.0
    %v120 = vadd.f32 %v118, %v119
    %v121 = vsel %vm78, %v38, 0.0
    %v122 = vadd.f32 %v120, %v121
    %v123 = vsel %vm78, %v39, 0.0
    %v124 = vadd.f32 %v122, %v123
    %v125 = vsel %vm78, %v40, 0.0
    %v126 = vadd.f32 %v124, %v125
    %v127 = vsel %vm78, %v41, 0.0
    %v128 = vadd.f32 %v126, %v127
    %v129 = vsel %vm90, %v42, 0.0
    %v130 = vadd.f32 %v128, %v129
    %v131 = vrot.slane %v130, 4
    %v132 = vadd.f32 %v130, %v131
    %v133 = vrot.slane %v132, 2
    %v134 = vadd.f32 %v132, %v133
    %v135 = vrot.slane %v134, 1
    %v136 = vadd.f32 %v134, %v135
    %v137 = vsel %vm78, %v43, 0.0
    %v138 = vsel %vm78, %v44, 0.0
    %v139 = vadd.f32 %v137, %v138
    %v140 = vsel %vm78, %v45, 0.0
    %v141 = vadd.f32 %v139, %v140
    %v142 = vsel %vm78, %v46, 0.0
    %v143 = vadd.f32 %v141, %v142
    %v144 = vsel %vm78, %v47, 0.0
    %v145 = vadd.f32 %v143, %v144
    %v146 = vsel %vm78, %v48, 0.0
    %v147 = vadd.f32 %v145, %v146
    %v148 = vsel %vm90, %v49, 0.0
    %v149 = vadd.f32 %v147, %v148
    %v150 = vrot.slane %v149, 4
    %v151 = vadd.f32 %v149, %v150
    %v152 = vrot.slane %v151, 2
    %v153 = vadd.f32 %v151, %v152
    %v154 = vrot.slane %v153, 1
    %v155 = vadd.f32 %v153, %v154
    %v156 = vsel %vm78, %v50, 0.0
    %v157 = vsel %vm78, %v51, 0.0
    %v158 = vadd.f32 %v156, %v157
    %v159 = vsel %vm78, %v52, 0.0
    %v160 = vadd.f32 %v158, %v159
    %v161 = vsel %vm78, %v53, 0.0
    %v162 = vadd.f32 %v160, %v161
    %v163 = vsel %vm78, %v54, 0.0
    %v164 = vadd.f32 %v162, %v163
    %v165 = vsel %vm78, %v55, 0.0
    %v166 = vadd.f32 %v164, %v165
    %v167 = vsel %vm90, %v56, 0.0
    %v168 = vadd.f32 %v166, %v167
    %v169 = vrot.slane %v168, 4
    %v170 = vadd.f32 %v168, %v169
    %v171 = vrot.slane %v170, 2
    %v172 = vadd.f32 %v170, %v171
    %v173 = vrot.slane %v172, 1
    %v174 = vadd.f32 %v172, %v173
    %v175 = vsel %vm78, %v57, 0.0
    %v176 = vsel %vm78, %v58, 0.0
    %v177 = vadd.f32 %v175, %v176
    %v178 = vsel %vm78, %v59, 0.0
    %v179 = vadd.f32 %v177, %v178
    %v180 = vsel %vm78, %v60, 0.0
    %v181 = vadd.f32 %v179, %v180
    %v182 = vsel %vm78, %v61, 0.0
    %v183 = vadd.f32 %v181, %v182
    %v184 = vsel %vm78, %v62, 0.0
    %v185 = vadd.f32 %v183, %v184
    %v186 = vsel %vm90, %v63, 0.0
    %v187 = vadd.f32 %v185, %v186
    %v188 = vrot.slane %v187, 4
    %v189 = vadd.f32 %v187, %v188
    %v190 = vrot.slane %v189, 2
    %v191 = vadd.f32 %v189, %v190
    %v192 = vrot.slane %v191, 1
    %v193 = vadd.f32 %v191, %v192
    %v194 = vsel %vm78, %v64, 0.0
    %v195 = vsel %vm78, %v65, 0.0
    %v196 = vadd.f32 %v194, %v195
    %v197 = vsel %vm78, %v66, 0.0
    %v198 = vadd.f32 %v196, %v197
    %v199 = vsel %vm78, %v67, 0.0
    %v200 = vadd.f32 %v198, %v199
    %v201 = vsel %vm78, %v68, 0.0
    %v202 = vadd.f32 %v200, %v201
    %v203 = vsel %vm78, %v69, 0.0
    %v204 = vadd.f32 %v202, %v203
    %v205 = vsel %vm90, %v70, 0.0
    %v206 = vadd.f32 %v204, %v205
    %v207 = vrot.slane %v206, 4
    %v208 = vadd.f32 %v206, %v207
    %v209 = vrot.slane %v208, 2
    %v210 = vadd.f32 %v208, %v209
    %v211 = vrot.slane %v210, 1
    %v212 = vadd.f32 %v210, %v211
    %v213 = vsel %vm78, %v71, 0.0
    %v214 = vsel %vm78, %v72, 0.0
    %v215 = vadd.f32 %v213, %v214
    %v216 = vsel %vm78, %v73, 0.0
    %v217 = vadd.f32 %v215, %v216
    %v218 = vsel %vm78, %v74, 0.0
    %v219 = vadd.f32 %v217, %v218
    %v220 = vsel %vm78, %v75, 0.0
    %v221 = vadd.f32 %v219, %v220
    %v222 = vsel %vm78, %v76, 0.0
    %v223 = vadd.f32 %v221, %v222
    %v224 = vsel %vm90, %v77, 0.0
    %v225 = vadd.f32 %v223, %v224
    %v226 = vrot.slane %v225, 4
    %v227 = vadd.f32 %v225, %v226
    %v228 = vrot.slane %v227, 2
    %v229 = vadd.f32 %v227, %v228
    %v230 = vrot.slane %v229, 1
    %v231 = vadd.f32 %v229, %v230
    %v232 = vrcp.pop 49.0
    %v233 = vmul.f32 %v98, %v232
    %v234 = vmul.f32 %v117, %v232
    %v235 = vmul.f32 %v136, %v232
    %v236 = vmul.f32 %v155, %v232
    %v237 = vmul.f32 %v174, %v232
    %v238 = vmul.f32 %v193, %v232
    %v239 = vmul.f32 %v212, %v232
    %v240 = vmul.f32 %v231, %v232
    %v241 = vld [vmem:[%s1] sm:$0xff]
    %v242 = vld [vmem:[%s1 + $0x8] sm:$0xff]
    %v243 = vld [vmem:[%s1 + $0x10] sm:$0xff]
    %v244 = vld [vmem:[%s1 + $0x18] sm:$0xff]
    %v245 = vld [vmem:[%s1 + $0x20] sm:$0xff]
    %v246 = vld [vmem:[%s1 + $0x28] sm:$0xff]
    %v247 = vld [vmem:[%s1 + $0x30] sm:$0xff]
    %v248 = vld [vmem:[%s1 + $0x38] sm:$0xff]
    %vm257 = vcmask 1041409
    %v258 = vsel %vm257, %v234, %v233
    %vm259 = vcmask 1042434
    %v260 = vsel %vm259, %v235, %v258
    %vm261 = vcmask 1043459
    %v262 = vsel %vm261, %v236, %v260
    %vm263 = vcmask 1044484
    %v264 = vsel %vm263, %v237, %v262
    %vm265 = vcmask 1045509
    %v266 = vsel %vm265, %v238, %v264
    %vm267 = vcmask 1046534
    %v268 = vsel %vm267, %v239, %v266
    %vm269 = vcmask 1047559
    %v270 = vsel %vm269, %v240, %v268
    %v271 = vsel %vm78, %v270, 0
    %273 = vmatprep.subr.mxu0 0.0
    %274 = vmatpush1.msra.mxu0 %v241
    %275 = vmatprep.subr.mxu0 0.0
    %276 = vmatpush1.msra.mxu0 %v242
    %277 = vmatprep.subr.mxu0 0.0
    %278 = vmatpush1.msra.mxu0 %v243
    %279 = vmatprep.subr.mxu0 0.0
    %280 = vmatpush1.msra.mxu0 %v244
    %281 = vmatprep.subr.mxu0 0.0
    %282 = vmatpush1.msra.mxu0 %v245
    %283 = vmatprep.subr.mxu0 0.0
    %284 = vmatpush1.msra.mxu0 %v246
    %285 = vmatprep.subr.mxu0 0.0
    %286 = vmatpush1.msra.mxu0 %v247
    %287 = vmatprep.subr.mxu0 0.0
    %288 = vmatpush1.msra.mxu0 %v248
    %289 = vmatprep.subr.mxu0 0.0
    %290 = vmatpush1.msra.mxu0 0.0
    %291 = vmatprep.subr.mxu0 0.0
    %292 = vmatpush1.msra.mxu0 0.0
    %293 = vmatprep.subr.mxu0 0.0
    %294 = vmatpush1.msra.mxu0 0.0
    %295 = vmatprep.subr.mxu0 0.0
    %296 = vmatpush1.msra.mxu0 0.0
    %297 = vmatprep.subr.mxu0 0.0
    %298 = vmatpush1.msra.mxu0 0.0
    %299 = vmatprep.subr.mxu0 0.0
    %300 = vmatpush1.msra.mxu0 0.0
    %301 = vmatprep.subr.mxu0 0.0
    %302 = vmatpush1.msra.mxu0 0.0
    %303 = vmatprep.subr.mxu0 0.0
    %304 = vmatpush1.msra.mxu0 0.0
    %305 = vmatprep.subr.mxu0 0.0
    %306 = vmatpush1.msra.mxu0 0.0
    %307 = vmatprep.subr.mxu0 0.0
    %308 = vmatpush1.msra.mxu0 0.0
    %309 = vmatprep.subr.mxu0 0.0
    %310 = vmatpush1.msra.mxu0 0.0
    %311 = vmatprep.subr.mxu0 0.0
    %312 = vmatpush1.msra.mxu0 0.0
    %313 = vmatprep.subr.mxu0 0.0
    %314 = vmatpush1.msra.mxu0 0.0
    %315 = vmatprep.subr.mxu0 0.0
    %316 = vmatpush1.msra.mxu0 0.0
    %317 = vmatprep.subr.mxu0 0.0
    %318 = vmatpush1.msra.mxu0 0.0
    %319 = vmatprep.subr.mxu0 0.0
    %320 = vmatpush1.msra.mxu0 0.0
    %321 = vmatprep.subr.mxu0 0.0
    %322 = vmatpush1.msra.mxu0 0.0
    %323 = vmatprep.subr.mxu0 0.0
    %324 = vmatpush1.msra.mxu0 0.0
    %325 = vmatprep.subr.mxu0 0.0
    %326 = vmatpush1.msra.mxu0 0.0
    %327 = vmatprep.subr.mxu0 0.0
    %328 = vmatpush1.msra.mxu0 0.0
    %329 = vmatprep.subr.mxu0 0.0
    %330 = vmatpush1.msra.mxu0 0.0
    %331 = vmatprep.subr.mxu0 0.0
    %332 = vmatpush1.msra.mxu0 0.0
    %333 = vmatprep.subr.mxu0 0.0
    %334 = vmatpush1.msra.mxu0 0.0
    %335 = vmatprep.subr.mxu0 0.0
    %336 = vmatpush1.msra.mxu0 0.0
    %337 = vmatprep.mubr.f32.mxu0 0.0
    %338 = vmatmul.mubr.f32.gmra.mrb[0].mxu0 %v271
    %v339 = vpop.f32.mrb[0].mxu0
    %v340 = vadd.f32 0.0, %v339
    %v341 = vpop.f32.mrb[0].mxu0
    %342 = vdwg.mxu0
    %v343 = vmax.f32 %v340, 0.0
    %v344 = vld [vmem:[%s2] sm:$0xf]
    %vm345 = vcmask 31744
    %v347 = vsel %vm345, %v343, 0
    %vm349 = vcmask 1043456
    %v351 = vsel %vm349, %v344, 0
    %353 = vmatprep.subr.mxu0 0.0
    %354 = vmatpush1.msra.mxu0 %v351
    %355 = vmatprep.subr.mxu0 0.0
    %356 = vmatpush1.msra.mxu0 0.0
    %357 = vmatprep.subr.mxu0 0.0
    %358 = vmatpush1.msra.mxu0 0.0
    %359 = vmatprep.subr.mxu0 0.0
    %360 = vmatpush1.msra.mxu0 0.0
    %361 = vmatprep.subr.mxu0 0.0
    %362 = vmatpush1.msra.mxu0 0.0
    %363 = vmatprep.subr.mxu0 0.0
    %364 = vmatpush1.msra.mxu0 0.0
    %365 = vmatprep.subr.mxu0 0.0
    %366 = vmatpush1.msra.mxu0 0.0
    %367 = vmatprep.subr.mxu0 0.0
    %368 = vmatpush1.msra.mxu0 0.0
    %369 = vmatprep.subr.mxu0 0.0
    %370 = vmatpush1.msra.mxu0 0.0
    %371 = vmatprep.subr.mxu0 0.0
    %372 = vmatpush1.msra.mxu0 0.0
    %373 = vmatprep.subr.mxu0 0.0
    %374 = vmatpush1.msra.mxu0 0.0
    %375 = vmatprep.subr.mxu0 0.0
    %376 = vmatpush1.msra.mxu0 0.0
    %377 = vmatprep.subr.mxu0 0.0
    %378 = vmatpush1.msra.mxu0 0.0
    %379 = vmatprep.subr.mxu0 0.0
    %380 = vmatpush1.msra.mxu0 0.0
    %381 = vmatprep.subr.mxu0 0.0
    %382 = vmatpush1.msra.mxu0 0.0
    %383 = vmatprep.subr.mxu0 0.0
    %384 = vmatpush1.msra.mxu0 0.0
    %385 = vmatprep.subr.mxu0 0.0
    %386 = vmatpush1.msra.mxu0 0.0
    %387 = vmatprep.subr.mxu0 0.0
    %388 = vmatpush1.msra.mxu0 0.0
    %389 = vmatprep.subr.mxu0 0.0
    %390 = vmatpush1.msra.mxu0 0.0
    %391 = vmatprep.subr.mxu0 0.0
    %392 = vmatpush1.msra.mxu0 0.0
    %393 = vmatprep.subr.mxu0 0.0
    %394 = vmatpush1.msra.mxu0 0.0
    %395 = vmatprep.subr.mxu0 0.0
    %396 = vmatpush1.msra.mxu0 0.0
    %397 = vmatprep.subr.mxu0 0.0
    %398 = vmatpush1.msra.mxu0 0.0
    %399 = vmatprep.subr.mxu0 0.0
    %400 = vmatpush1.msra.mxu0 0.0
    %401 = vmatprep.subr.mxu0 0.0
    %402 = vmatpush1.msra.mxu0 0.0
    %403 = vmatprep.subr.mxu0 0.0
    %404 = vmatpush1.msra.mxu0 0.0
    %405 = vmatprep.subr.mxu0 0.0
    %406 = vmatpush1.msra.mxu0 0.0
    %407 = vmatprep.subr.mxu0 0.0
    %408 = vmatpush1.msra.mxu0 0.0
    %409 = vmatprep.subr.mxu0 0.0
    %410 = vmatpush1.msra.mxu0 0.0
    %411 = vmatprep.subr.mxu0 0.0
    %412 = vmatpush1.msra.mxu0 0.0
    %413 = vmatprep.subr.mxu0 0.0
    %414 = vmatpush1.msra.mxu0 0.0
    %415 = vmatprep.subr.mxu0 0.0
    %416 = vmatpush1.msra.mxu0 0.0
    %417 = vmatprep.mubr.f32.mxu0 0.0
    %418 = vmatmul.mubr.f32.gmra.mrb[0].mxu0 %v347
    %v419 = vpop.f32.mrb[0].mxu0
    %v420 = vadd.f32 0.0, %v419
    %v421 = vpop.f32.mrb[0].mxu0
    %422 = vdwg.mxu0
    %v423 = vxor.u32 %v420, 2147483648
    %v424 = vmul.f32 %v423, 1.442695
    %v425 = vpow.pop %v424
    %v426 = vadd.f32 %v425, 1.0
    %v427 = vrcp.pop %v426
    %v428 = vmul.f32 1.0, %v427
    %429 = vst.msk [vmem:[#allocation2] sm:$0xff] %vm78, %v428
    %v430 = vld [vmem:[%s3] sm:$0xf]
    %431 = vrot.lane.b32.xlu0 %v343, 124
    %v432 = vpop.permute.xlu0 %431
    %v433 = vsel %vm345, %v432, 0
    %v436 = vsel %vm349, %v430, 0
    %438 = vmatprep.subr.mxu0 0.0
    %439 = vmatpush1.msra.mxu0 %v436
    %440 = vmatprep.subr.mxu0 0.0
    %441 = vmatpush1.msra.mxu0 0.0
    %442 = vmatprep.subr.mxu0 0.0
    %443 = vmatpush1.msra.mxu0 0.0
    %444 = vmatprep.subr.mxu0 0.0
    %445 = vmatpush1.msra.mxu0 0.0
    %446 = vmatprep.subr.mxu0 0.0
    %447 = vmatpush1.msra.mxu0 0.0
    %448 = vmatprep.subr.mxu0 0.0
    %449 = vmatpush1.msra.mxu0 0.0
    %450 = vmatprep.subr.mxu0 0.0
    %451 = vmatpush1.msra.mxu0 0.0
    %452 = vmatprep.subr.mxu0 0.0
    %453 = vmatpush1.msra.mxu0 0.0
    %454 = vmatprep.subr.mxu0 0.0
    %455 = vmatpush1.msra.mxu0 0.0
    %456 = vmatprep.subr.mxu0 0.0
    %457 = vmatpush1.msra.mxu0 0.0
    %458 = vmatprep.subr.mxu0 0.0
    %459 = vmatpush1.msra.mxu0 0.0
    %460 = vmatprep.subr.mxu0 0.0
    %461 = vmatpush1.msra.mxu0 0.0
    %462 = vmatprep.subr.mxu0 0.0
    %463 = vmatpush1.msra.mxu0 0.0
    %464 = vmatprep.subr.mxu0 0.0
    %465 = vmatpush1.msra.mxu0 0.0
    %466 = vmatprep.subr.mxu0 0.0
    %467 = vmatpush1.msra.mxu0 0.0
    %468 = vmatprep.subr.mxu0 0.0
    %469 = vmatpush1.msra.mxu0 0.0
    %470 = vmatprep.subr.mxu0 0.0
    %471 = vmatpush1.msra.mxu0 0.0
    %472 = vmatprep.subr.mxu0 0.0
    %473 = vmatpush1.msra.mxu0 0.0
    %474 = vmatprep.subr.mxu0 0.0
    %475 = vmatpush1.msra.mxu0 0.0
    %476 = vmatprep.subr.mxu0 0.0
    %477 = vmatpush1.msra.mxu0 0.0
    %478 = vmatprep.subr.mxu0 0.0
    %479 = vmatpush1.msra.mxu0 0.0
    %480 = vmatprep.subr.mxu0 0.0
    %481 = vmatpush1.msra.mxu0 0.0
    %482 = vmatprep.subr.mxu0 0.0
    %483 = vmatpush1.msra.mxu0 0.0
    %484 = vmatprep.subr.mxu0 0.0
    %485 = vmatpush1.msra.mxu0 0.0
    %486 = vmatprep.subr.mxu0 0.0
    %487 = vmatpush1.msra.mxu0 0.0
    %488 = vmatprep.subr.mxu0 0.0
    %489 = vmatpush1.msra.mxu0 0.0
    %490 = vmatprep.subr.mxu0 0.0
    %491 = vmatpush1.msra.mxu0 0.0
    %492 = vmatprep.subr.mxu0 0.0
    %493 = vmatpush1.msra.mxu0 0.0
    %494 = vmatprep.subr.mxu0 0.0
    %495 = vmatpush1.msra.mxu0 0.0
    %496 = vmatprep.subr.mxu0 0.0
    %497 = vmatpush1.msra.mxu0 0.0
    %498 = vmatprep.subr.mxu0 0.0
    %499 = vmatpush1.msra.mxu0 0.0
    %500 = vmatprep.subr.mxu0 0.0
    %501 = vmatpush1.msra.mxu0 0.0
    %502 = vmatprep.mubr.f32.mxu0 0.0
    %503 = vmatmul.mubr.f32.gmra.mrb[0].mxu0 %v433
    %v504 = vpop.f32.mrb[0].mxu0
    %v505 = vadd.f32 0.0, %v504
    %v506 = vpop.f32.mrb[0].mxu0
    %507 = vdwg.mxu0
    %v508 = vxor.u32 %v505, 2147483648
    %v509 = vmul.f32 %v508, 1.442695
    %v510 = vpow.pop %v509
    %v511 = vadd.f32 %v510, 1.0
    %v512 = vrcp.pop %v511
    %v513 = vmul.f32 1.0, %v512
    %514 = vst.msk [vmem:[#allocation4] sm:$0xff] %vm78, %v513
    %v515 = vmax.f32 %v22, 1e-06
    %v516 = vmax.f32 %v23, 1e-06
    %v517 = vmax.f32 %v24, 1e-06
    %v518 = vmax.f32 %v25, 1e-06
    %v519 = vmax.f32 %v26, 1e-06
    %v520 = vmax.f32 %v27, 1e-06
    %v521 = vmax.f32 %v28, 1e-06
    %v522 = vmax.f32 %v29, 1e-06
    %v523 = vmax.f32 %v30, 1e-06
    %v524 = vmax.f32 %v31, 1e-06
    %v525 = vmax.f32 %v32, 1e-06
    %v526 = vmax.f32 %v33, 1e-06
    %v527 = vmax.f32 %v34, 1e-06
    %v528 = vmax.f32 %v35, 1e-06
    %v529 = vmax.f32 %v36, 1e-06
    %v530 = vmax.f32 %v37, 1e-06
    %v531 = vmax.f32 %v38, 1e-06
    %v532 = vmax.f32 %v39, 1e-06
    %v533 = vmax.f32 %v40, 1e-06
    %v534 = vmax.f32 %v41, 1e-06
    %v535 = vmax.f32 %v42, 1e-06
    %v536 = vmax.f32 %v43, 1e-06
    %v537 = vmax.f32 %v44, 1e-06
    %v538 = vmax.f32 %v45, 1e-06
    %v539 = vmax.f32 %v46, 1e-06
    %v540 = vmax.f32 %v47, 1e-06
    %v541 = vmax.f32 %v48, 1e-06
    %v542 = vmax.f32 %v49, 1e-06
    %v543 = vmax.f32 %v50, 1e-06
    %v544 = vmax.f32 %v51, 1e-06
    %v545 = vmax.f32 %v52, 1e-06
    %v546 = vmax.f32 %v53, 1e-06
    %v547 = vmax.f32 %v54, 1e-06
    %v548 = vmax.f32 %v55, 1e-06
    %v549 = vmax.f32 %v56, 1e-06
    %v550 = vmax.f32 %v57, 1e-06
    %v551 = vmax.f32 %v58, 1e-06
    %v552 = vmax.f32 %v59, 1e-06
    %v553 = vmax.f32 %v60, 1e-06
    %v554 = vmax.f32 %v61, 1e-06
    %v555 = vmax.f32 %v62, 1e-06
    %v556 = vmax.f32 %v63, 1e-06
    %v557 = vmax.f32 %v64, 1e-06
    %v558 = vmax.f32 %v65, 1e-06
    %v559 = vmax.f32 %v66, 1e-06
    %v560 = vmax.f32 %v67, 1e-06
    %v561 = vmax.f32 %v68, 1e-06
    %v562 = vmax.f32 %v69, 1e-06
    %v563 = vmax.f32 %v70, 1e-06
    %v564 = vmax.f32 %v71, 1e-06
    %v565 = vmax.f32 %v72, 1e-06
    %v566 = vmax.f32 %v73, 1e-06
    %v567 = vmax.f32 %v74, 1e-06
    %v568 = vmax.f32 %v75, 1e-06
    %v569 = vmax.f32 %v76, 1e-06
    %v570 = vmax.f32 %v77, 1e-06
    %v571 = vmul.f32 %v515, %v515
    %v572 = vmul.f32 %v516, %v516
    %v573 = vmul.f32 %v517, %v517
    %v574 = vmul.f32 %v518, %v518
    %v575 = vmul.f32 %v519, %v519
    %v576 = vmul.f32 %v520, %v520
    %v577 = vmul.f32 %v521, %v521
    %v578 = vmul.f32 %v522, %v522
    %v579 = vmul.f32 %v523, %v523
    %v580 = vmul.f32 %v524, %v524
    %v581 = vmul.f32 %v525, %v525
    %v582 = vmul.f32 %v526, %v526
    %v583 = vmul.f32 %v527, %v527
    %v584 = vmul.f32 %v528, %v528
    %v585 = vmul.f32 %v529, %v529
    %v586 = vmul.f32 %v530, %v530
    %v587 = vmul.f32 %v531, %v531
    %v588 = vmul.f32 %v532, %v532
    %v589 = vmul.f32 %v533, %v533
    %v590 = vmul.f32 %v534, %v534
    %v591 = vmul.f32 %v535, %v535
    %v592 = vmul.f32 %v536, %v536
    %v593 = vmul.f32 %v537, %v537
    %v594 = vmul.f32 %v538, %v538
    %v595 = vmul.f32 %v539, %v539
    %v596 = vmul.f32 %v540, %v540
    %v597 = vmul.f32 %v541, %v541
    %v598 = vmul.f32 %v542, %v542
    %v599 = vmul.f32 %v543, %v543
    %v600 = vmul.f32 %v544, %v544
    %v601 = vmul.f32 %v545, %v545
    %v602 = vmul.f32 %v546, %v546
    %v603 = vmul.f32 %v547, %v547
    %v604 = vmul.f32 %v548, %v548
    %v605 = vmul.f32 %v549, %v549
    %v606 = vmul.f32 %v550, %v550
    %v607 = vmul.f32 %v551, %v551
    %v608 = vmul.f32 %v552, %v552
    %v609 = vmul.f32 %v553, %v553
    %v610 = vmul.f32 %v554, %v554
    %v611 = vmul.f32 %v555, %v555
    %v612 = vmul.f32 %v556, %v556
    %v613 = vmul.f32 %v557, %v557
    %v614 = vmul.f32 %v558, %v558
    %v615 = vmul.f32 %v559, %v559
    %v616 = vmul.f32 %v560, %v560
    %v617 = vmul.f32 %v561, %v561
    %v618 = vmul.f32 %v562, %v562
    %v619 = vmul.f32 %v563, %v563
    %v620 = vmul.f32 %v564, %v564
    %v621 = vmul.f32 %v565, %v565
    %v622 = vmul.f32 %v566, %v566
    %v623 = vmul.f32 %v567, %v567
    %v624 = vmul.f32 %v568, %v568
    %v625 = vmul.f32 %v569, %v569
    %v626 = vmul.f32 %v570, %v570
    %v627 = vmul.f32 %v571, %v515
    %v628 = vmul.f32 %v572, %v516
    %v629 = vmul.f32 %v573, %v517
    %v630 = vmul.f32 %v574, %v518
    %v631 = vmul.f32 %v575, %v519
    %v632 = vmul.f32 %v576, %v520
    %v633 = vmul.f32 %v577, %v521
    %v634 = vmul.f32 %v578, %v522
    %v635 = vmul.f32 %v579, %v523
    %v636 = vmul.f32 %v580, %v524
    %v637 = vmul.f32 %v581, %v525
    %v638 = vmul.f32 %v582, %v526
    %v639 = vmul.f32 %v583, %v527
    %v640 = vmul.f32 %v584, %v528
    %v641 = vmul.f32 %v585, %v529
    %v642 = vmul.f32 %v586, %v530
    %v643 = vmul.f32 %v587, %v531
    %v644 = vmul.f32 %v588, %v532
    %v645 = vmul.f32 %v589, %v533
    %v646 = vmul.f32 %v590, %v534
    %v647 = vmul.f32 %v591, %v535
    %v648 = vmul.f32 %v592, %v536
    %v649 = vmul.f32 %v593, %v537
    %v650 = vmul.f32 %v594, %v538
    %v651 = vmul.f32 %v595, %v539
    %v652 = vmul.f32 %v596, %v540
    %v653 = vmul.f32 %v597, %v541
    %v654 = vmul.f32 %v598, %v542
    %v655 = vmul.f32 %v599, %v543
    %v656 = vmul.f32 %v600, %v544
    %v657 = vmul.f32 %v601, %v545
    %v658 = vmul.f32 %v602, %v546
    %v659 = vmul.f32 %v603, %v547
    %v660 = vmul.f32 %v604, %v548
    %v661 = vmul.f32 %v605, %v549
    %v662 = vmul.f32 %v606, %v550
    %v663 = vmul.f32 %v607, %v551
    %v664 = vmul.f32 %v608, %v552
    %v665 = vmul.f32 %v609, %v553
    %v666 = vmul.f32 %v610, %v554
    %v667 = vmul.f32 %v611, %v555
    %v668 = vmul.f32 %v612, %v556
    %v669 = vmul.f32 %v613, %v557
    %v670 = vmul.f32 %v614, %v558
    %v671 = vmul.f32 %v615, %v559
    %v672 = vmul.f32 %v616, %v560
    %v673 = vmul.f32 %v617, %v561
    %v674 = vmul.f32 %v618, %v562
    %v675 = vmul.f32 %v619, %v563
    %v676 = vmul.f32 %v620, %v564
    %v677 = vmul.f32 %v621, %v565
    %v678 = vmul.f32 %v622, %v566
    %v679 = vmul.f32 %v623, %v567
    %v680 = vmul.f32 %v624, %v568
    %v681 = vmul.f32 %v625, %v569
    %v682 = vmul.f32 %v626, %v570
    %v683 = vsel %vm78, %v627, 0.0
    %v684 = vsel %vm78, %v628, 0.0
    %v685 = vadd.f32 %v683, %v684
    %v686 = vsel %vm78, %v629, 0.0
    %v687 = vadd.f32 %v685, %v686
    %v688 = vsel %vm78, %v630, 0.0
    %v689 = vadd.f32 %v687, %v688
    %v690 = vsel %vm78, %v631, 0.0
    %v691 = vadd.f32 %v689, %v690
    %v692 = vsel %vm78, %v632, 0.0
    %v693 = vadd.f32 %v691, %v692
    %v694 = vsel %vm90, %v633, 0.0
    %v695 = vadd.f32 %v693, %v694
    %v696 = vrot.slane %v695, 4
    %v697 = vadd.f32 %v695, %v696
    %v698 = vrot.slane %v697, 2
    %v699 = vadd.f32 %v697, %v698
    %v700 = vrot.slane %v699, 1
    %v701 = vadd.f32 %v699, %v700
    %v702 = vsel %vm78, %v634, 0.0
    %v703 = vsel %vm78, %v635, 0.0
    %v704 = vadd.f32 %v702, %v703
    %v705 = vsel %vm78, %v636, 0.0
    %v706 = vadd.f32 %v704, %v705
    %v707 = vsel %vm78, %v637, 0.0
    %v708 = vadd.f32 %v706, %v707
    %v709 = vsel %vm78, %v638, 0.0
    %v710 = vadd.f32 %v708, %v709
    %v711 = vsel %vm78, %v639, 0.0
    %v712 = vadd.f32 %v710, %v711
    %v713 = vsel %vm90, %v640, 0.0
    %v714 = vadd.f32 %v712, %v713
    %v715 = vrot.slane %v714, 4
    %v716 = vadd.f32 %v714, %v715
    %v717 = vrot.slane %v716, 2
    %v718 = vadd.f32 %v716, %v717
    %v719 = vrot.slane %v718, 1
    %v720 = vadd.f32 %v718, %v719
    %v721 = vsel %vm78, %v641, 0.0
    %v722 = vsel %vm78, %v642, 0.0
    %v723 = vadd.f32 %v721, %v722
    %v724 = vsel %vm78, %v643, 0.0
    %v725 = vadd.f32 %v723, %v724
    %v726 = vsel %vm78, %v644, 0.0
    %v727 = vadd.f32 %v725, %v726
    %v728 = vsel %vm78, %v645, 0.0
    %v729 = vadd.f32 %v727, %v728
    %v730 = vsel %vm78, %v646, 0.0
    %v731 = vadd.f32 %v729, %v730
    %v732 = vsel %vm90, %v647, 0.0
    %v733 = vadd.f32 %v731, %v732
    %v734 = vrot.slane %v733, 4
    %v735 = vadd.f32 %v733, %v734
    %v736 = vrot.slane %v735, 2
    %v737 = vadd.f32 %v735, %v736
    %v738 = vrot.slane %v737, 1
    %v739 = vadd.f32 %v737, %v738
    %v740 = vsel %vm78, %v648, 0.0
    %v741 = vsel %vm78, %v649, 0.0
    %v742 = vadd.f32 %v740, %v741
    %v743 = vsel %vm78, %v650, 0.0
    %v744 = vadd.f32 %v742, %v743
    %v745 = vsel %vm78, %v651, 0.0
    %v746 = vadd.f32 %v744, %v745
    %v747 = vsel %vm78, %v652, 0.0
    %v748 = vadd.f32 %v746, %v747
    %v749 = vsel %vm78, %v653, 0.0
    %v750 = vadd.f32 %v748, %v749
    %v751 = vsel %vm90, %v654, 0.0
    %v752 = vadd.f32 %v750, %v751
    %v753 = vrot.slane %v752, 4
    %v754 = vadd.f32 %v752, %v753
    %v755 = vrot.slane %v754, 2
    %v756 = vadd.f32 %v754, %v755
    %v757 = vrot.slane %v756, 1
    %v758 = vadd.f32 %v756, %v757
    %v759 = vsel %vm78, %v655, 0.0
    %v760 = vsel %vm78, %v656, 0.0
    %v761 = vadd.f32 %v759, %v760
    %v762 = vsel %vm78, %v657, 0.0
    %v763 = vadd.f32 %v761, %v762
    %v764 = vsel %vm78, %v658, 0.0
    %v765 = vadd.f32 %v763, %v764
    %v766 = vsel %vm78, %v659, 0.0
    %v767 = vadd.f32 %v765, %v766
    %v768 = vsel %vm78, %v660, 0.0
    %v769 = vadd.f32 %v767, %v768
    %v770 = vsel %vm90, %v661, 0.0
    %v771 = vadd.f32 %v769, %v770
    %v772 = vrot.slane %v771, 4
    %v773 = vadd.f32 %v771, %v772
    %v774 = vrot.slane %v773, 2
    %v775 = vadd.f32 %v773, %v774
    %v776 = vrot.slane %v775, 1
    %v777 = vadd.f32 %v775, %v776
    %v778 = vsel %vm78, %v662, 0.0
    %v779 = vsel %vm78, %v663, 0.0
    %v780 = vadd.f32 %v778, %v779
    %v781 = vsel %vm78, %v664, 0.0
    %v782 = vadd.f32 %v780, %v781
    %v783 = vsel %vm78, %v665, 0.0
    %v784 = vadd.f32 %v782, %v783
    %v785 = vsel %vm78, %v666, 0.0
    %v786 = vadd.f32 %v784, %v785
    %v787 = vsel %vm78, %v667, 0.0
    %v788 = vadd.f32 %v786, %v787
    %v789 = vsel %vm90, %v668, 0.0
    %v790 = vadd.f32 %v788, %v789
    %v791 = vrot.slane %v790, 4
    %v792 = vadd.f32 %v790, %v791
    %v793 = vrot.slane %v792, 2
    %v794 = vadd.f32 %v792, %v793
    %v795 = vrot.slane %v794, 1
    %v796 = vadd.f32 %v794, %v795
    %v797 = vsel %vm78, %v669, 0.0
    %v798 = vsel %vm78, %v670, 0.0
    %v799 = vadd.f32 %v797, %v798
    %v800 = vsel %vm78, %v671, 0.0
    %v801 = vadd.f32 %v799, %v800
    %v802 = vsel %vm78, %v672, 0.0
    %v803 = vadd.f32 %v801, %v802
    %v804 = vsel %vm78, %v673, 0.0
    %v805 = vadd.f32 %v803, %v804
    %v806 = vsel %vm78, %v674, 0.0
    %v807 = vadd.f32 %v805, %v806
    %v808 = vsel %vm90, %v675, 0.0
    %v809 = vadd.f32 %v807, %v808
    %v810 = vrot.slane %v809, 4
    %v811 = vadd.f32 %v809, %v810
    %v812 = vrot.slane %v811, 2
    %v813 = vadd.f32 %v811, %v812
    %v814 = vrot.slane %v813, 1
    %v815 = vadd.f32 %v813, %v814
    %v816 = vsel %vm78, %v676, 0.0
    %v817 = vsel %vm78, %v677, 0.0
    %v818 = vadd.f32 %v816, %v817
    %v819 = vsel %vm78, %v678, 0.0
    %v820 = vadd.f32 %v818, %v819
    %v821 = vsel %vm78, %v679, 0.0
    %v822 = vadd.f32 %v820, %v821
    %v823 = vsel %vm78, %v680, 0.0
    %v824 = vadd.f32 %v822, %v823
    %v825 = vsel %vm78, %v681, 0.0
    %v826 = vadd.f32 %v824, %v825
    %v827 = vsel %vm90, %v682, 0.0
    %v828 = vadd.f32 %v826, %v827
    %v829 = vrot.slane %v828, 4
    %v830 = vadd.f32 %v828, %v829
    %v831 = vrot.slane %v830, 2
    %v832 = vadd.f32 %v830, %v831
    %v833 = vrot.slane %v832, 1
    %v834 = vadd.f32 %v832, %v833
    %v835 = vmul.f32 %v701, %v232
    %v836 = vmul.f32 %v720, %v232
    %v837 = vmul.f32 %v739, %v232
    %v838 = vmul.f32 %v758, %v232
    %v839 = vmul.f32 %v777, %v232
    %v840 = vmul.f32 %v796, %v232
    %v841 = vmul.f32 %v815, %v232
    %v842 = vmul.f32 %v834, %v232
    %v843 = vlog2.pop %v835
    %v844 = vmul.f32 %v843, 0.6931472
    %v845 = vlog2.pop %v836
    %v846 = vmul.f32 %v845, 0.6931472
    %v847 = vlog2.pop %v837
    %v848 = vmul.f32 %v847, 0.6931472
    %v849 = vlog2.pop %v838
    %v850 = vmul.f32 %v849, 0.6931472
    %v851 = vlog2.pop %v839
    %v852 = vmul.f32 %v851, 0.6931472
    %v853 = vlog2.pop %v840
    %v854 = vmul.f32 %v853, 0.6931472
    %v855 = vlog2.pop %v841
    %v856 = vmul.f32 %v855, 0.6931472
    %v857 = vlog2.pop %v842
    %v858 = vmul.f32 %v857, 0.6931472
    %v859 = vmul.f32 %v844, 0.33333334
    %v860 = vmul.f32 %v846, 0.33333334
    %v861 = vmul.f32 %v848, 0.33333334
    %v862 = vmul.f32 %v850, 0.33333334
    %v863 = vmul.f32 %v852, 0.33333334
    %v864 = vmul.f32 %v854, 0.33333334
    %v865 = vmul.f32 %v856, 0.33333334
    %v866 = vmul.f32 %v858, 0.33333334
    %v867 = vmul.f32 %v859, 1.442695
    %v868 = vpow.pop %v867
    %v869 = vmul.f32 %v860, 1.442695
    %v870 = vpow.pop %v869
    %v871 = vmul.f32 %v861, 1.442695
    %v872 = vpow.pop %v871
    %v873 = vmul.f32 %v862, 1.442695
    %v874 = vpow.pop %v873
    %v875 = vmul.f32 %v863, 1.442695
    %v876 = vpow.pop %v875
    %v877 = vmul.f32 %v864, 1.442695
    %v878 = vpow.pop %v877
    %v879 = vmul.f32 %v865, 1.442695
    %v880 = vpow.pop %v879
    %v881 = vmul.f32 %v866, 1.442695
    %v882 = vpow.pop %v881
    %v891 = vsel %vm257, %v870, %v868
    %v892 = vsel %vm259, %v872, %v891
    %v893 = vsel %vm261, %v874, %v892
    %v894 = vsel %vm263, %v876, %v893
    %v895 = vsel %vm265, %v878, %v894
    %v896 = vsel %vm267, %v880, %v895
    %v897 = vsel %vm269, %v882, %v896
    %899 = vst.msk [vmem:[#allocation6] sm:$0xff] %vm78, %v897
    // Predicated region
    $region18: #{tpu_custom_call.1} parent=1 // pred_check
      _
    $region19: #{tpu_custom_call.1} parent=1 // pred_check_branch
      %901 = sbr.rel (0) target = $region21
    $region20: #{tpu_custom_call.1} parent=1 // pred_region
      %s903 = ssub.s32 128, 128
      %904 = vsyncadd [#allocation3], %s903
      %s906 = sshll.u32 [#allocation2], 4
      %s907 = int_to_ptr.vmem [resolvable:$true] %s906
      %909 = dma.vmem_to_hbm [thread:$0]  %s907, 128, %s4, [#allocation3]
    $region21: #{tpu_custom_call.1} parent=1 // pred_fallthru
      _
    // Predicated region
    $region22: #{tpu_custom_call.1} parent=1 // pred_check
      _
    $region23: #{tpu_custom_call.1} parent=1 // pred_check_branch
      %911 = sbr.rel (0) target = $region25
    $region24: #{tpu_custom_call.1} parent=1 // pred_region
      %s913 = ssub.s32 128, 128
      %914 = vsyncadd [#allocation5], %s913
      %s916 = sshll.u32 [#allocation4], 4
      %s917 = int_to_ptr.vmem [resolvable:$true] %s916
      %919 = dma.vmem_to_hbm [thread:$0]  %s917, 128, %s5, [#allocation5]
    $region25: #{tpu_custom_call.1} parent=1 // pred_fallthru
      _
    // Predicated region
    $region26: #{tpu_custom_call.1} parent=1 // pred_check
      _
    $region27: #{tpu_custom_call.1} parent=1 // pred_check_branch
      %921 = sbr.rel (0) target = $region29
    $region28: #{tpu_custom_call.1} parent=1 // pred_region
      %s923 = ssub.s32 128, 128
      %924 = vsyncadd [#allocation5], %s923
      %s926 = sshll.u32 [#allocation6], 4
      %s927 = int_to_ptr.vmem [resolvable:$true] %s926
      %929 = dma.vmem_to_hbm [thread:$0]  %s927, 128, %s6, [#allocation5]
    $region29: #{tpu_custom_call.1} parent=1 // pred_fallthru
      _
    // Predicated region
    $region30: #{tpu_custom_call.1} parent=1 // pred_check
      _
    $region31: #{tpu_custom_call.1} parent=1 // pred_check_branch
      %931 = sbr.rel (0) target = $region33
    $region32: #{tpu_custom_call.1} parent=1 // pred_region
      %932 = dma.done [#allocation3], 128
    $region33: #{tpu_custom_call.1} parent=1 // pred_fallthru
      _
    // Predicated region
    $region34: #{tpu_custom_call.1} parent=1 // pred_check
      _
    $region35: #{tpu_custom_call.1} parent=1 // pred_check_branch
      %934 = sbr.rel (0) target = $region37
    $region36: #{tpu_custom_call.1} parent=1 // pred_region
      %935 = dma.done [#allocation5], 128
    $region37: #{tpu_custom_call.1} parent=1 // pred_fallthru
      _
    // Predicated region
    $region38: #{tpu_custom_call.1} parent=1 // pred_check
      _
    $region39: #{tpu_custom_call.1} parent=1 // pred_check_branch
      %937 = sbr.rel (0) target = $region41
    $region40: #{tpu_custom_call.1} parent=1 // pred_region
      %938 = dma.done [#allocation5], 128
    $region41: #{tpu_custom_call.1} parent=1 // pred_fallthru
      _
    %939 = vsyncpa [#allocation3], 1
    %940 = vsyncpa [#allocation5], 1

</llo_original>
